<compile_context>
chip_gen: v7x
topology: tpu7x:2x2x1
jax: 0.10.0
libtpu: 0.0.40
codegen_flags: <defaults>
</compile_context>

<pallas_src>
import jax
import jax.numpy as jnp
from jax.experimental import pallas as pl
from jax.experimental.pallas import tpu as pltpu


def gcn_kernel(x_ref, g_ref, w_ref, b_ref, o_ref, h_ref):
    """One grid step.

    x_ref: (Bt*N, Din) or (Bt, N, Din)   node features for Bt graphs
    g_ref: (Bt, Tn, N)                   row tile of the adjacency matrices
    w_ref: (Din, Dout)                   shared weight
    b_ref: (1, Dout)                     shared bias (f32)
    o_ref: (Bt, Tn, Dout)                output row tile
    h_ref: VMEM scratch (Bt, N, Dout)    relu(x@w+b), cached across row tiles
    """
    d_in = w_ref.shape[0]
    bt, n, d_out = h_ref.shape

    # (1) Shared-weight GEMM + bias + ReLU.  Only on the first row tile of
    #     each batch block (row axis is innermost); the result is cached in
    #     VMEM scratch and reused by every subsequent row tile.
    @pl.when(pl.program_id(1) == 0)
    def _():
        xf = x_ref[...].reshape(bt * n, d_in)          # no-op if already 2-D
        h = jnp.dot(xf, w_ref[...], preferred_element_type=jnp.float32)
        h = jnp.maximum(h + b_ref[...], 0.0)           # f32 epilogue on VPU
        h_ref[...] = h.reshape(bt, n, d_out).astype(h_ref.dtype)

    # (2) Per-graph propagation: batched MXU matmul with f32 accumulation.
    out = jnp.einsum("bij,bjd->bid", g_ref[...], h_ref[...],
                     preferred_element_type=jnp.float32)
    o_ref[...] = out.astype(o_ref.dtype)


_VMEM_BUDGET = 40 << 20   # conservative: v7x has 64 MiB physical VMEM per TC


def _step_vmem_bytes(bt, tn, n, d_in, d_out, itemsize):
    """Rough per-step VMEM need (pipeline double-buffers inputs/outputs)."""
    x_blk = bt * n * d_in * itemsize
    g_blk = bt * tn * n * itemsize
    o_blk = bt * tn * d_out * itemsize
    wb = d_in * d_out * itemsize + d_out * 4
    h_scr = bt * n * d_out * itemsize
    f32_tmp = 4 * bt * (n + tn) * d_out          # pre-cast h + out accumulator
    return 2 * (x_blk + g_blk + o_blk + wb) + h_scr + f32_tmp


def _choose_tiles(batch, n, d_in, d_out, itemsize):
    """Pick (block_b, block_rows)."""
    # (a) fuse enough graphs per step to amortize pipeline overhead.
    target_bt = max(1, 512 // max(n, 1))
    target_bt = min(target_bt, batch)
    # (b) keep >= 2 steps along the (parallel) batch axis when possible so
    #     both v7x TensorCores get work.
    if batch >= 2:
        target_bt = max(1, min(target_bt, batch // 2))
    # (c) largest divisor of batch <= target that fits VMEM with tn = n.
    for bt in range(target_bt, 0, -1):
        if batch % bt == 0 and _step_vmem_bytes(
                bt, n, n, d_in, d_out, itemsize) <= _VMEM_BUDGET:
            return bt, n
    # (d) even a single graph does not fit: row-tile the adjacency matrix.
    for tn in range(n, 0, -1):
        if n % tn or (tn % 8 and tn != n):
            continue   # block last-2 dims must be 8-aligned or full-extent
        if _step_vmem_bytes(1, tn, n, d_in, d_out, itemsize) <= _VMEM_BUDGET:
            return 1, tn
    legal = [t for t in range(8, n + 1, 8) if n % t == 0] or [n]
    return 1, legal[0]


def gcn_forward(x, g, w, b, *, block_b=None, block_rows=None,
                compute_dtype=None):
    """x: (B, N, Din), g: (B, N, N), w: (Din, Dout), b: (Dout,)."""
    batch, n, d_in = x.shape
    d_out = w.shape[1]
    out_dtype = x.dtype

    # Optional bf16 MXU path (v6e/v7x); accumulation stays f32 in-kernel.
    if compute_dtype is not None:
        x = x.astype(compute_dtype)
        g = g.astype(compute_dtype)
        w = w.astype(compute_dtype)
    b2 = b.astype(jnp.float32).reshape(1, d_out)

    itemsize = jnp.dtype(x.dtype).itemsize
    auto_bt, auto_tn = _choose_tiles(batch, n, d_in, d_out, itemsize)
    bt = block_b if block_b is not None else auto_bt
    tn = block_rows if block_rows is not None else auto_tn
    assert batch % bt == 0 and n % tn == 0, (batch, bt, n, tn)
    grid = (batch // bt, n // tn)

    # Flatten x on the host when the flattened row block keeps (8, _) sublane
    # alignment; the kernel then feeds one tall GEMM with no in-kernel
    # relayout.  Otherwise keep the 3-D block (always layout-legal).
    flat_rows = bt * n
    if flat_rows % 8 == 0 or bt == batch:
        x_in = x.reshape(batch * n, d_in)
        x_spec = pl.BlockSpec((flat_rows, d_in), lambda i, r: (i, 0))
    else:
        x_in = x
        x_spec = pl.BlockSpec((bt, n, d_in), lambda i, r: (i, 0, 0))

    # Advisory cost for XLA's scheduler.
    flops = 2 * batch * n * d_out * (d_in + n)
    bytes_accessed = (itemsize * batch * n * (d_in + n)
                      + jnp.dtype(out_dtype).itemsize * batch * n * d_out
                      + itemsize * d_in * d_out + 4 * d_out)

    step_bytes = _step_vmem_bytes(bt, tn, n, d_in, d_out, itemsize)
    vmem_limit = int(min(64 << 20, max(32 << 20, step_bytes * 3 // 2)))

    return pl.pallas_call(
        gcn_kernel,
        out_shape=jax.ShapeDtypeStruct((batch, n, d_out), out_dtype),
        grid_spec=pltpu.PrefetchScalarGridSpec(
            num_scalar_prefetch=0,
            grid=grid,
            in_specs=[
                x_spec,
                pl.BlockSpec((bt, tn, n), lambda i, r: (i, r, 0)),
                pl.BlockSpec((d_in, d_out), lambda i, r: (0, 0)),
                pl.BlockSpec((1, d_out), lambda i, r: (0, 0)),
            ],
            out_specs=pl.BlockSpec((bt, tn, d_out), lambda i, r: (i, r, 0)),
            scratch_shapes=[pltpu.VMEM((bt, n, d_out), x.dtype)],
        ),
        compiler_params=pltpu.CompilerParams(
            dimension_semantics=("parallel", "arbitrary"),
            vmem_limit_bytes=vmem_limit,
        ),
        cost_estimate=pl.CostEstimate(
            flops=flops, transcendentals=0, bytes_accessed=int(bytes_accessed)),
    )(x_in, g, w, b2)


def _reference(x, g, w, b):
    return jnp.matmul(g, jnp.maximum(jnp.matmul(x, w) + b, 0.0))


if __name__ == "__main__":
    # Small shapes consistent with the module: batch=2, N=8 nodes,
    # in_dim=16, out_dim=32.
    B, N, Din, Dout = 2, 8, 16, 32

    key = jax.random.PRNGKey(0)
    kx, kg, kw = jax.random.split(key, 3)

    x = jax.random.normal(kx, (B, N, Din), dtype=jnp.float32)
    g = jax.random.normal(kg, (B, N, N), dtype=jnp.float32)
    w = jax.random.normal(kw, (Din, Dout), dtype=jnp.float32)
    b = jnp.zeros((Dout,), dtype=jnp.float32)

    out = jax.block_until_ready(gcn_forward(x, g, w, b))
    ref = _reference(x, g, w, b)
    assert out.shape == (B, N, Dout)
    assert jnp.allclose(out, ref, atol=1e-3, rtol=1e-3)

    # Larger batch: exercises multi-graph blocking (Bt > 1) and the tall
    # flattened shared-weight GEMM.
    B2, N2 = 8, 16
    kx2, kg2 = jax.random.split(jax.random.PRNGKey(1), 2)
    x2 = jax.random.normal(kx2, (B2, N2, Din), dtype=jnp.float32)
    g2 = jax.random.normal(kg2, (B2, N2, N2), dtype=jnp.float32)
    out2 = jax.block_until_ready(gcn_forward(x2, g2, w, b))
    ref2 = _reference(x2, g2, w, b)
    assert out2.shape == (B2, N2, Dout)
    assert jnp.allclose(out2, ref2, atol=1e-3, rtol=1e-3)

    # bf16 MXU operand path (v6e/v7x optimization), f32 accumulate + epilogue.
    out_bf = jax.block_until_ready(
        gcn_forward(x2, g2, w, b, compute_dtype=jnp.bfloat16))
    assert jnp.allclose(out_bf, ref2, atol=1.0, rtol=1e-1)

    # Row-tiled path (forced): h computed once per batch block under pl.when
    # and reused across 4 row tiles of g -- the large-N VMEM escape hatch.
    B3, N3 = 2, 32
    kx3, kg3 = jax.random.split(jax.random.PRNGKey(2), 2)
    x3 = jax.random.normal(kx3, (B3, N3, Din), dtype=jnp.float32)
    g3 = jax.random.normal(kg3, (B3, N3, N3), dtype=jnp.float32)
    out3 = jax.block_until_ready(
        gcn_forward(x3, g3, w, b, block_b=1, block_rows=8))
    ref3 = _reference(x3, g3, w, b)
    assert jnp.allclose(out3, ref3, atol=1e-3, rtol=1e-3)

    # Odd node count: exercises the 3-D (non-flattened) x fallback path.
    B4, N4 = 2, 6
    kx4, kg4 = jax.random.split(jax.random.PRNGKey(3), 2)
    x4 = jax.random.normal(kx4, (B4, N4, Din), dtype=jnp.float32)
    g4 = jax.random.normal(kg4, (B4, N4, N4), dtype=jnp.float32)
    out4 = jax.block_until_ready(gcn_forward(x4, g4, w, b))
    ref4 = _reference(x4, g4, w, b)
    assert jnp.allclose(out4, ref4, atol=1e-3, rtol=1e-3)

    print("KERNEL_OK")
</pallas_src>

<mosaic_0001>
module attributes {stable_mosaic.version = 11 : i64} {
  func.func @gcn_kernel(%arg0: i32, %arg1: i32, %arg2: memref<8x16xf32, #tpu.memory_space<vmem>>, %arg3: memref<1x8x8xf32, #tpu.memory_space<vmem>>, %arg4: memref<16x32xf32, #tpu.memory_space<vmem>>, %arg5: memref<1x32xf32, #tpu.memory_space<vmem>>, %arg6: memref<1x8x32xf32, #tpu.memory_space<vmem>>, %arg7: memref<1x8x32xf32, #tpu.memory_space<vmem>>) attributes {dimension_semantics = [#tpu.dimension_semantics<parallel>, #tpu.dimension_semantics<arbitrary>], iteration_bounds = array<i64: 2, 1>, scalar_prefetch = 0 : i64, scratch_operands = 1 : i64, tpu.core_type = #tpu.core_type<tc>, window_params = [{transform_indices = @transform_0, window_bounds = array<i64: 8, 16>}, {transform_indices = @transform_1, window_bounds = array<i64: 1, 8, 8>}, {pipeline_mode = #tpu.pipeline_mode<synchronous>, transform_indices = @transform_2, window_bounds = array<i64: 16, 32>}, {pipeline_mode = #tpu.pipeline_mode<synchronous>, transform_indices = @transform_3, window_bounds = array<i64: 1, 32>}, {transform_indices = @transform_4, window_bounds = array<i64: 1, 8, 32>}]} {
    %c0_i32 = arith.constant 0 : i32
    %0 = arith.cmpi eq, %arg1, %c0_i32 : i32
    %1 = arith.extui %0 : i1 to i32
    %c0_i32_0 = arith.constant 0 : i32
    %2 = arith.cmpi ne, %1, %c0_i32_0 : i32
    scf.if %2 {
      %c0_9 = arith.constant 0 : index
      %c0_10 = arith.constant 0 : index
      %7 = vector.load %arg2[%c0_9, %c0_10] : memref<8x16xf32, #tpu.memory_space<vmem>>, vector<8x16xf32>
      %c0_11 = arith.constant 0 : index
      %c0_12 = arith.constant 0 : index
      %8 = vector.load %arg4[%c0_11, %c0_12] : memref<16x32xf32, #tpu.memory_space<vmem>>, vector<16x32xf32>
      %cst_13 = arith.constant dense<0.000000e+00> : vector<8x32xf32>
      %9 = tpu.matmul %7, %8, %cst_13 {dimension_numbers = #tpu.dot_dimension_numbers<[1], [0], [0], [1], [0, 0, 1, 1], [], []>} : vector<8x16xf32>, vector<16x32xf32>, vector<8x32xf32> -> vector<8x32xf32>
      %c0_14 = arith.constant 0 : index
      %c0_15 = arith.constant 0 : index
      %10 = vector.load %arg5[%c0_14, %c0_15] : memref<1x32xf32, #tpu.memory_space<vmem>>, vector<1x32xf32>
      %11 = vector.broadcast %10 : vector<1x32xf32> to vector<8x32xf32>
      %12 = arith.addf %9, %11 : vector<8x32xf32>
      %cst_16 = arith.constant 0.000000e+00 : f32
      %13 = vector.broadcast %cst_16 : f32 to vector<8x32xf32>
      %14 = arith.maximumf %12, %13 : vector<8x32xf32>
      %15 = vector.shape_cast %14 : vector<8x32xf32> to vector<1x8x32xf32>
      %c0_17 = arith.constant 0 : index
      %c0_18 = arith.constant 0 : index
      %c0_19 = arith.constant 0 : index
      %16 = vector.load %arg7[%c0_17, %c0_18, %c0_19] : memref<1x8x32xf32, #tpu.memory_space<vmem>>, vector<1x8x32xf32>
      tpu.vector_store %arg7[%c0_17, %c0_18, %c0_19], %15 {strides = array<i32>} : memref<1x8x32xf32, #tpu.memory_space<vmem>>, vector<1x8x32xf32>,
    } else {
    }
    %c0 = arith.constant 0 : index
    %c0_1 = arith.constant 0 : index
    %c0_2 = arith.constant 0 : index
    %3 = vector.load %arg3[%c0, %c0_1, %c0_2] : memref<1x8x8xf32, #tpu.memory_space<vmem>>, vector<1x8x8xf32>
    %c0_3 = arith.constant 0 : index
    %c0_4 = arith.constant 0 : index
    %c0_5 = arith.constant 0 : index
    %4 = vector.load %arg7[%c0_3, %c0_4, %c0_5] : memref<1x8x32xf32, #tpu.memory_space<vmem>>, vector<1x8x32xf32>
    "tpu.trace_start"() <{level = 10 : i32, message = "bij,bjd->bid"}> : () -> ()
    %cst = arith.constant dense<0.000000e+00> : vector<1x8x32xf32>
    %5 = tpu.matmul %3, %4, %cst {dimension_numbers = #tpu.dot_dimension_numbers<[2], [1], [1], [2], [0, 0, 0, 1, 1, 2], [0], [0]>} : vector<1x8x8xf32>, vector<1x8x32xf32>, vector<1x8x32xf32> -> vector<1x8x32xf32>
    "tpu.trace_stop"() : () -> ()
    %c0_6 = arith.constant 0 : index
    %c0_7 = arith.constant 0 : index
    %c0_8 = arith.constant 0 : index
    %6 = vector.load %arg6[%c0_6, %c0_7, %c0_8] : memref<1x8x32xf32, #tpu.memory_space<vmem>>, vector<1x8x32xf32>
    tpu.vector_store %arg6[%c0_6, %c0_7, %c0_8], %5 {strides = array<i32>} : memref<1x8x32xf32, #tpu.memory_space<vmem>>, vector<1x8x32xf32>,
    return
  }
  func.func @transform_0(%arg0: i32, %arg1: i32) -> (i32, i32) {
    %c0_i32 = arith.constant 0 : i32
    %c0_i32_0 = arith.constant 0 : i32
    return %arg0, %c0_i32 : i32, i32
  }
  func.func @transform_1(%arg0: i32, %arg1: i32) -> (i32, i32, i32) {
    %c0_i32 = arith.constant 0 : i32
    %c0_i32_0 = arith.constant 0 : i32
    return %arg0, %arg1, %c0_i32 : i32, i32, i32
  }
  func.func @transform_2(%arg0: i32, %arg1: i32) -> (i32, i32) {
    %c0_i32 = arith.constant 0 : i32
    %c0_i32_0 = arith.constant 0 : i32
    %c0_i32_1 = arith.constant 0 : i32
    return %c0_i32, %c0_i32_0 : i32, i32
  }
  func.func @transform_3(%arg0: i32, %arg1: i32) -> (i32, i32) {
    %c0_i32 = arith.constant 0 : i32
    %c0_i32_0 = arith.constant 0 : i32
    %c0_i32_1 = arith.constant 0 : i32
    return %c0_i32, %c0_i32_0 : i32, i32
  }
  func.func @transform_4(%arg0: i32, %arg1: i32) -> (i32, i32, i32) {
    %c0_i32 = arith.constant 0 : i32
    %c0_i32_0 = arith.constant 0 : i32
    return %arg0, %arg1, %c0_i32 : i32, i32, i32
  }
}

</mosaic_0001>

<llo_original>
// kernel: tpu_custom_call.1
$region0: #{tpu_custom_call.1}
  #allocation0 [shape = 'u32[]', space=smem, size = 0x4, offset = 0x4, fixed_abs, tag = 'smem constant byte address 0x4 - core index']
  #allocation1 [shape = 'u32[144,128]{1,0:T(1,128)}', space=vmem, size = 0x12000, scoped, tag = 'internal scratch']
  #allocation2 [shape = 'f32[1,8,32]{2,1,0:T(8,128)}', space=vmem, size = 0x1000, scoped, tag = 'scratch operand']
  %s0 = inlined_call_operand.hbm [shape: f32[16,16], index: 0, kind: input, shape index: {}]
  %s1 = inlined_call_operand.hbm [shape: f32[2,8,8], index: 1, kind: input, shape index: {}]
  %s2 = inlined_call_operand.hbm [shape: f32[16,32], index: 2, kind: input, shape index: {}]
  %s3 = inlined_call_operand.vmem [shape: f32[1,32], index: 3, kind: input, shape index: {}]
  %s4 = inlined_call_operand.hbm [shape: f32[2,8,32], index: 4, kind: output, shape index: {}]
  %s5 = sld [smem:[#allocation0]]
  $region65: #{tpu_custom_call.1} parent=0
    _
  %s7 = ssub.s32 1, %s5
  %s8 = scalar_select 0, %s7, %s5
  $region1: #{tpu_custom_call.1} parent=0
    #allocation3 [shape = 'u8[8192]{0}', space=vmem, size = 0x2000, scoped, tag = 'input window, operand 0']
    #allocation4 [shape = 's32[2]{0}', space=sflag, size = 0x8, scoped, tag = 'scoped memory for tpu_custom_call.1']
    #allocation5 [shape = 's32[2]{0}', space=sflag, size = 0x8, scoped, tag = 'scoped memory for tpu_custom_call.1']
    #allocation6 [shape = 'u8[8192]{0}', space=vmem, size = 0x2000, scoped, tag = 'input window, operand 1']
    #allocation7 [shape = 's32[2]{0}', space=sflag, size = 0x8, scoped, tag = 'scoped memory for tpu_custom_call.1']
    #allocation8 [shape = 'u8[8192]{0}', space=vmem, size = 0x2000, scoped, tag = 'input window, operand 2, single buffered']
    #allocation9 [shape = 'u8[8192]{0}', space=vmem, size = 0x2000, scoped, tag = 'output window, operand 0']
    %9 = vsyncpa [#allocation4], 0
    %s10 = scalar_lea.sflag [#allocation4], 1
    %11 = vsyncpa %s10, 0
    %12 = vsyncpa [#allocation7], 0
    %s13 = scalar_lea.sflag [#allocation7], 1
    %14 = vsyncpa %s13, 0
    %15 = vsyncpa [#allocation5], 0
    %s16 = scalar_lea.sflag [#allocation5], 1
    %17 = vsyncpa %s16, 0
    loop: start=0, step=1, limit=4
    $region2: #{tpu_custom_call.1} parent=1 // loop_pre_header
      _
    $region3: #{tpu_custom_call.1} parent=1 // loop_header
      %s19 = sphi 0, %s23
      %p20 = scmp.ge.s32.totalorder %s19, 4
      %s26 = sphi 0, %s38
      %s27 = sphi 0, %s34
      %s28 = sphi 0, %s26
      %s29 = sphi 0, %s27
      %s30 = sphi 0, %s28
      %s31 = sphi 0, %s29
      %s41 = sphi 0, %s43
      %s44 = sphi 0, %s41
      %s45 = sphi 0, %s44
      %s61 = sphi 0, %s45
      %s69 = sphi 0, %s71
      %s72 = sphi 0, %s69
      %s73 = sphi 0, %s72
      %s89 = sphi 0, %s73
      %s93 = sphi 0, %s93
      %s95 = sphi 0, %s93
      %s96 = sphi 0, %s95
      %s110 = sphi 0, %s96
      %s114 = sphi 0, %s114
      %s116 = sphi 0, %s114
      %s117 = sphi 0, %s116
      %s131 = sphi 0, %s117
      %s139 = sphi 0, %s141
      %s142 = sphi 0, %s139
      %s143 = sphi 0, %s142
      %s159 = sphi 0, %s143
    $region4: #{tpu_custom_call.1} parent=1 // loop_header_branch
      %22 = sbr.rel (%p20) target = $region8
    $region5: #{tpu_custom_call.1} parent=1 // loop_body
      %s24 = ssub.s32 %s19, 1
      %s25 = ssub.s32 %s19, 2
      %s32 = sadd.s32 1, %s27
      %p33 = scmp.ge.s32.totalorder %s32, 1
      %s34 = scalar_select %p33, 0, %s32
      %s35 = sadd.s32 1, %s26
      %s36 = scalar_select %p33, %s35, %s26
      %p37 = scmp.ge.s32.totalorder %s36, 2
      %s38 = scalar_select %p37, 0, %s36
      %s39 = ssub.s32 %s26, %s38
      %p40 = scmp.eq.s32.totalorder %s39, 0
      %s42 = sadd.s32 %s41, 1
      %s43 = scalar_select %p40, %s41, %s42
      %p46 = pneg %p40
      %p47 = scmp.eq.s32.totalorder %s19, 1
      %p48 = por %p46, %p47
      %p49 = scmp.ne.s32.totalorder %s41, %s44
      %p50 = scmp.eq.s32.totalorder %s19, 0
      %p51 = por %p49, %p50
      %p52 = scmp.ne.s32.totalorder %s41, %s44
      %p53 = scmp.eq.s32.totalorder %s24, 1
      %p54 = por %p52, %p53
      %p55 = scmp.ne.s32.totalorder %s44, %s45
      %p56 = scmp.eq.s32.totalorder %s24, 0
      %p57 = por %p55, %p56
      %p58 = scmp.ne.s32.totalorder %s44, %s45
      %p59 = scmp.eq.s32.totalorder %s25, 1
      %p60 = por %p58, %p59
      %p62 = scmp.ne.s32.totalorder %s45, %s61
      %p63 = scmp.eq.s32.totalorder %s25, 0
      %p64 = por %p62, %p63
      %s65 = ssub.s32 %s26, %s38
      %s66 = ssub.s32 %s27, %s34
      %s67 = sor.u32 %s65, %s66
      %p68 = scmp.eq.s32.totalorder %s67, 0
      %s70 = sadd.s32 %s69, 1
      %s71 = scalar_select %p68, %s69, %s70
      %p74 = pneg %p68
      %p75 = scmp.eq.s32.totalorder %s19, 1
      %p76 = por %p74, %p75
      %p77 = scmp.ne.s32.totalorder %s69, %s72
      %p78 = scmp.eq.s32.totalorder %s19, 0
      %p79 = por %p77, %p78
      %p80 = scmp.ne.s32.totalorder %s69, %s72
      %p81 = scmp.eq.s32.totalorder %s24, 1
      %p82 = por %p80, %p81
      %p83 = scmp.ne.s32.totalorder %s72, %s73
      %p84 = scmp.eq.s32.totalorder %s24, 0
      %p85 = por %p83, %p84
      %p86 = scmp.ne.s32.totalorder %s72, %s73
      %p87 = scmp.eq.s32.totalorder %s25, 1
      %p88 = por %p86, %p87
      %p90 = scmp.ne.s32.totalorder %s73, %s89
      %p91 = scmp.eq.s32.totalorder %s25, 0
      %p92 = por %p90, %p91
      %s94 = sadd.s32 %s93, 1
      %p97 = scmp.eq.s32.totalorder %s19, 1
      %p98 = scmp.ne.s32.totalorder %s93, %s95
      %p99 = scmp.eq.s32.totalorder %s19, 0
      %p100 = por %p98, %p99
      %p101 = scmp.ne.s32.totalorder %s93, %s95
      %p102 = scmp.eq.s32.totalorder %s24, 1
      %p103 = por %p101, %p102
      %p104 = scmp.ne.s32.totalorder %s95, %s96
      %p105 = scmp.eq.s32.totalorder %s24, 0
      %p106 = por %p104, %p105
      %p107 = scmp.ne.s32.totalorder %s95, %s96
      %p108 = scmp.eq.s32.totalorder %s25, 1
      %p109 = por %p107, %p108
      %p111 = scmp.ne.s32.totalorder %s96, %s110
      %p112 = scmp.eq.s32.totalorder %s25, 0
      %p113 = por %p111, %p112
      %s115 = sadd.s32 %s114, 1
      %p118 = scmp.eq.s32.totalorder %s19, 1
      %p119 = scmp.ne.s32.totalorder %s114, %s116
      %p120 = scmp.eq.s32.totalorder %s19, 0
      %p121 = por %p119, %p120
      %p122 = scmp.ne.s32.totalorder %s114, %s116
      %p123 = scmp.eq.s32.totalorder %s24, 1
      %p124 = por %p122, %p123
      %p125 = scmp.ne.s32.totalorder %s116, %s117
      %p126 = scmp.eq.s32.totalorder %s24, 0
      %p127 = por %p125, %p126
      %p128 = scmp.ne.s32.totalorder %s116, %s117
      %p129 = scmp.eq.s32.totalorder %s25, 1
      %p130 = por %p128, %p129
      %p132 = scmp.ne.s32.totalorder %s117, %s131
      %p133 = scmp.eq.s32.totalorder %s25, 0
      %p134 = por %p132, %p133
      %s135 = ssub.s32 %s26, %s38
      %s136 = ssub.s32 %s27, %s34
      %s137 = sor.u32 %s135, %s136
      %p138 = scmp.eq.s32.totalorder %s137, 0
      %s140 = sadd.s32 %s139, 1
      %s141 = scalar_select %p138, %s139, %s140
      %p144 = pneg %p138
      %p145 = scmp.eq.s32.totalorder %s19, 1
      %p146 = por %p144, %p145
      %p147 = scmp.ne.s32.totalorder %s139, %s142
      %p148 = scmp.eq.s32.totalorder %s19, 0
      %p149 = por %p147, %p148
      %p150 = scmp.ne.s32.totalorder %s139, %s142
      %p151 = scmp.eq.s32.totalorder %s24, 1
      %p152 = por %p150, %p151
      %p153 = scmp.ne.s32.totalorder %s142, %s143
      %p154 = scmp.eq.s32.totalorder %s24, 0
      %p155 = por %p153, %p154
      %p156 = scmp.ne.s32.totalorder %s142, %s143
      %p157 = scmp.eq.s32.totalorder %s25, 1
      %p158 = por %p156, %p157
      %p160 = scmp.ne.s32.totalorder %s143, %s159
      %p161 = scmp.eq.s32.totalorder %s25, 0
      %p162 = por %p160, %p161
      %p163 = scmp.le.s32.totalorder 1, %s19
      %p164 = scmp.lt.s32.totalorder %s19, 3
      %p165 = pnand %p163, %p164
      %p166 = pneg %p165
      // Predicated region
      $region9: #{tpu_custom_call.1} parent=5 // pred_check
        _
      $region10: #{tpu_custom_call.1} parent=5 // pred_check_branch
        %168 = sbr.rel (%p165) target = $region12
      $region11: #{tpu_custom_call.1} parent=5 // pred_region
        %s169 = ssub.s32 %s19, 1
        // Predicated region
        $region13: #{tpu_custom_call.1} parent=11 // pred_check
          %p170 = pneg %p106
        $region14: #{tpu_custom_call.1} parent=11 // pred_check_branch
          %172 = sbr.rel (%p170) target = $region16
        $region15: #{tpu_custom_call.1} parent=11 // pred_region
          %s174 = ssub.s32 256, 256
          %175 = vsyncadd [#allocation7], %s174
          %s176 = sshll.u32 [#allocation8], 4
          %s177 = int_to_ptr.vmem [resolvable:$true] %s176
          %182 = dma.hbm_to_vmem [thread:$0]  %s2, 256, %s177, [#allocation7], 128, 128, 8
        $region16: #{tpu_custom_call.1} parent=11 // pred_fallthru
          _
        // Predicated region
        $region17: #{tpu_custom_call.1} parent=11 // pred_check
          %p183 = pneg %p127
        $region18: #{tpu_custom_call.1} parent=11 // pred_check_branch
          %185 = sbr.rel (%p183) target = $region20
        $region19: #{tpu_custom_call.1} parent=11 // pred_region
          _
        $region20: #{tpu_custom_call.1} parent=11 // pred_fallthru
          _
      $region12: #{tpu_custom_call.1} parent=5 // pred_fallthru
        _
      %p186 = scmp.lt.s32.totalorder %s19, 2
      // Predicated region
      $region21: #{tpu_custom_call.1} parent=5 // pred_check
        %p187 = pneg %p186
      $region22: #{tpu_custom_call.1} parent=5 // pred_check_branch
        %189 = sbr.rel (%p187) target = $region24
      $region23: #{tpu_custom_call.1} parent=5 // pred_region
        // Predicated region
        $region25: #{tpu_custom_call.1} parent=23 // pred_check
          %p190 = pneg %p51
        $region26: #{tpu_custom_call.1} parent=23 // pred_check_branch
          %192 = sbr.rel (%p190) target = $region28
        $region27: #{tpu_custom_call.1} parent=23 // pred_region
          %s193 = sand.u32 %s41, 1
          %s194 = scalar_lea.sflag [#allocation4], %s193
          %s195 = sand.u32 %s41, 1
          %s196 = smul.addr %s195, 8
          %s197 = scalar_lea.vmem [#allocation3], %s196
          %s199 = ssub.s32 128, 128
          %200 = vsyncadd %s194, %s199
          %s201 = smul.addr %s26, 128
          %s202 = scalar_lea.hbm %s0, %s201
          %s204 = sshll.u32 %s197, 4
          %s205 = int_to_ptr.vmem [resolvable:$true] %s204
          %207 = dma.hbm_to_vmem [thread:$0]  %s202, 128, %s205, %s194
        $region28: #{tpu_custom_call.1} parent=23 // pred_fallthru
          _
        // Predicated region
        $region29: #{tpu_custom_call.1} parent=23 // pred_check
          %p208 = pneg %p79
        $region30: #{tpu_custom_call.1} parent=23 // pred_check_branch
          %210 = sbr.rel (%p208) target = $region32
        $region31: #{tpu_custom_call.1} parent=23 // pred_region
          %s211 = sand.u32 %s19, 1
          %s212 = scalar_lea.sflag [#allocation7], %s211
          %s213 = sand.u32 %s69, 1
          %s214 = smul.addr %s213, 8
          %s215 = scalar_lea.vmem [#allocation6], %s214
          %s217 = ssub.s32 128, 128
          %218 = vsyncadd %s212, %s217
          %s219 = sadd.s32 %s27, %s26
          %s220 = smul.addr %s219, 128
          %s221 = scalar_lea.hbm %s1, %s220
          %s223 = sshll.u32 %s215, 4
          %s224 = int_to_ptr.vmem [resolvable:$true] %s223
          %226 = dma.hbm_to_vmem [thread:$0]  %s221, 128, %s224, %s212
        $region32: #{tpu_custom_call.1} parent=23 // pred_fallthru
          _
      $region24: #{tpu_custom_call.1} parent=5 // pred_fallthru
        _
      %p227 = scmp.le.s32.totalorder 1, %s19
      %p228 = scmp.lt.s32.totalorder %s19, 3
      %p229 = pnand %p227, %p228
      %p230 = pneg %p229
      // Predicated region
      $region33: #{tpu_custom_call.1} parent=5 // pred_check
        _
      $region34: #{tpu_custom_call.1} parent=5 // pred_check_branch
        %232 = sbr.rel (%p229) target = $region36
      $region35: #{tpu_custom_call.1} parent=5 // pred_region
        %s233 = ssub.s32 %s19, 1
        %s234 = sand.u32 %s44, 1
        %s235 = scalar_lea.sflag [#allocation4], %s234
        %s236 = sand.u32 %s44, 1
        %s237 = smul.addr %s236, 8
        %s238 = scalar_lea.vmem [#allocation3], %s237
        // Predicated region
        $region37: #{tpu_custom_call.1} parent=35 // pred_check
          %p239 = pneg %p57
        $region38: #{tpu_custom_call.1} parent=35 // pred_check_branch
          %241 = sbr.rel (%p239) target = $region40
        $region39: #{tpu_custom_call.1} parent=35 // pred_region
          %242 = dma.done %s235, 128
        $region40: #{tpu_custom_call.1} parent=35 // pred_fallthru
          _
        %s243 = sand.u32 %s24, 1
        %s244 = scalar_lea.sflag [#allocation7], %s243
        %s245 = sand.u32 %s72, 1
        %s246 = smul.addr %s245, 8
        %s247 = scalar_lea.vmem [#allocation6], %s246
        // Predicated region
        $region41: #{tpu_custom_call.1} parent=35 // pred_check
          %p248 = pneg %p85
        $region42: #{tpu_custom_call.1} parent=35 // pred_check_branch
          %250 = sbr.rel (%p248) target = $region44
        $region43: #{tpu_custom_call.1} parent=35 // pred_region
          %251 = dma.done %s244, 128
        $region44: #{tpu_custom_call.1} parent=35 // pred_fallthru
          _
        // Predicated region
        $region45: #{tpu_custom_call.1} parent=35 // pred_check
          %p252 = pneg %p106
        $region46: #{tpu_custom_call.1} parent=35 // pred_check_branch
          %254 = sbr.rel (%p252) target = $region48
        $region47: #{tpu_custom_call.1} parent=35 // pred_region
          %255 = dma.done [#allocation7], 256
        $region48: #{tpu_custom_call.1} parent=35 // pred_fallthru
          _
        %s256 = sand.u32 %s44, 1
        %s257 = scalar_lea.sflag [#allocation4], %s256
        %s258 = sand.u32 %s44, 1
        %s259 = smul.addr %s258, 8
        %s260 = scalar_lea.vmem [#allocation3], %s259
        %p261 = pneg %p57
        %p262 = pneg %p54
        %s263 = sand.u32 %s24, 1
        %s264 = scalar_lea.sflag [#allocation7], %s263
        %s265 = sand.u32 %s72, 1
        %s266 = smul.addr %s265, 8
        %s267 = scalar_lea.vmem [#allocation6], %s266
        %p268 = pneg %p85
        %p269 = pneg %p82
        %p270 = pneg %p106
        %p271 = pneg %p103
        %p272 = pneg %p127
        %p273 = pneg %p124
        %p274 = pneg %p155
        %p275 = pneg %p152
        %s276 = sand.u32 %s142, 1
        %s277 = scalar_lea.sflag [#allocation5], %s276
        %s278 = sand.u32 %s142, 1
        %s279 = smul.addr %s278, 8
        %s280 = scalar_lea.vmem [#allocation9], %s279
        %p281 = scmp.eq.s32.totalorder %s29, 0
        // Predicated region
        $region49: #{tpu_custom_call.1} parent=35 // pred_check
          %p282 = pneg %p281
        $region50: #{tpu_custom_call.1} parent=35 // pred_check_branch
          %284 = sbr.rel (%p282) target = $region52
        $region51: #{tpu_custom_call.1} parent=35 // pred_region
          %v285 = vld [vmem:[%s238] sm:$0xff]
          %v286 = vld [vmem:[#allocation8] sm:$0xff]
          %v287 = vld [vmem:[#allocation8 + $0x8] sm:$0xff]
          %v288 = vld [vmem:[%s3] sm:$0x1]
          %v290 = vlaneseq
          %v291 = vshrl.u32 %v290, 7
          %v292 = vsub.s32 0, %v291
          %v293 = vrot.slane %v288, %v292
          %vm295 = vcmask 130048
          %v297 = vsel %vm295, %v285, 0
          %299 = vmatprep.subr.mxu0 0.0
          %300 = vmatpush1.msra.mxu0 %v286
          %301 = vmatprep.subr.mxu0 0.0
          %302 = vmatpush1.msra.mxu0 %v287
          %303 = vmatprep.subr.mxu0 0.0
          %304 = vmatpush1.msra.mxu0 0.0
          %305 = vmatprep.subr.mxu0 0.0
          %306 = vmatpush1.msra.mxu0 0.0
          %307 = vmatprep.subr.mxu0 0.0
          %308 = vmatpush1.msra.mxu0 0.0
          %309 = vmatprep.subr.mxu0 0.0
          %310 = vmatpush1.msra.mxu0 0.0
          %311 = vmatprep.subr.mxu0 0.0
          %312 = vmatpush1.msra.mxu0 0.0
          %313 = vmatprep.subr.mxu0 0.0
          %314 = vmatpush1.msra.mxu0 0.0
          %315 = vmatprep.subr.mxu0 0.0
          %316 = vmatpush1.msra.mxu0 0.0
          %317 = vmatprep.subr.mxu0 0.0
          %318 = vmatpush1.msra.mxu0 0.0
          %319 = vmatprep.subr.mxu0 0.0
          %320 = vmatpush1.msra.mxu0 0.0
          %321 = vmatprep.subr.mxu0 0.0
          %322 = vmatpush1.msra.mxu0 0.0
          %323 = vmatprep.subr.mxu0 0.0
          %324 = vmatpush1.msra.mxu0 0.0
          %325 = vmatprep.subr.mxu0 0.0
          %326 = vmatpush1.msra.mxu0 0.0
          %327 = vmatprep.subr.mxu0 0.0
          %328 = vmatpush1.msra.mxu0 0.0
          %329 = vmatprep.subr.mxu0 0.0
          %330 = vmatpush1.msra.mxu0 0.0
          %331 = vmatprep.subr.mxu0 0.0
          %332 = vmatpush1.msra.mxu0 0.0
          %333 = vmatprep.subr.mxu0 0.0
          %334 = vmatpush1.msra.mxu0 0.0
          %335 = vmatprep.subr.mxu0 0.0
          %336 = vmatpush1.msra.mxu0 0.0
          %337 = vmatprep.subr.mxu0 0.0
          %338 = vmatpush1.msra.mxu0 0.0
          %339 = vmatprep.subr.mxu0 0.0
          %340 = vmatpush1.msra.mxu0 0.0
          %341 = vmatprep.subr.mxu0 0.0
          %342 = vmatpush1.msra.mxu0 0.0
          %343 = vmatprep.subr.mxu0 0.0
          %344 = vmatpush1.msra.mxu0 0.0
          %345 = vmatprep.subr.mxu0 0.0
          %346 = vmatpush1.msra.mxu0 0.0
          %347 = vmatprep.subr.mxu0 0.0
          %348 = vmatpush1.msra.mxu0 0.0
          %349 = vmatprep.subr.mxu0 0.0
          %350 = vmatpush1.msra.mxu0 0.0
          %351 = vmatprep.subr.mxu0 0.0
          %352 = vmatpush1.msra.mxu0 0.0
          %353 = vmatprep.subr.mxu0 0.0
          %354 = vmatpush1.msra.mxu0 0.0
          %355 = vmatprep.subr.mxu0 0.0
          %356 = vmatpush1.msra.mxu0 0.0
          %357 = vmatprep.subr.mxu0 0.0
          %358 = vmatpush1.msra.mxu0 0.0
          %359 = vmatprep.subr.mxu0 0.0
          %360 = vmatpush1.msra.mxu0 0.0
          %361 = vmatprep.subr.mxu0 0.0
          %362 = vmatpush1.msra.mxu0 0.0
          %363 = vmatprep.mubr.f32.mxu0 0.0
          %364 = vmatmul.mubr.f32.gmra.mrb[0].mxu0 %v297
          %v365 = vpop.f32.mrb[0].mxu0
          %v366 = vadd.f32 %v293, %v365
          %v367 = vpop.f32.mrb[0].mxu0
          %368 = vdwg.mxu0
          %v369 = vmax.f32 %v366, 0.0
          %vm370 = vcmask 261120
          %371 = vst.msk [vmem:[#allocation2] sm:$0xff] %vm370, %v369
        $region52: #{tpu_custom_call.1} parent=35 // pred_fallthru
          _
        %v372 = vld [vmem:[%s247] sm:$0xff]
        %v373 = vld [vmem:[#allocation2] sm:$0xff]
        %vm374 = vcmask 64512
        %v376 = vsel %vm374, %v372, 0
        %378 = vmatprep.subr.mxu0 0.0
        %379 = vmatpush1.msra.mxu0 %v373
        %380 = vmatprep.subr.mxu0 0.0
        %381 = vmatpush1.msra.mxu0 0.0
        %382 = vmatprep.subr.mxu0 0.0
        %383 = vmatpush1.msra.mxu0 0.0
        %384 = vmatprep.subr.mxu0 0.0
        %385 = vmatpush1.msra.mxu0 0.0
        %386 = vmatprep.subr.mxu0 0.0
        %387 = vmatpush1.msra.mxu0 0.0
        %388 = vmatprep.subr.mxu0 0.0
        %389 = vmatpush1.msra.mxu0 0.0
        %390 = vmatprep.subr.mxu0 0.0
        %391 = vmatpush1.msra.mxu0 0.0
        %392 = vmatprep.subr.mxu0 0.0
        %393 = vmatpush1.msra.mxu0 0.0
        %394 = vmatprep.subr.mxu0 0.0
        %395 = vmatpush1.msra.mxu0 0.0
        %396 = vmatprep.subr.mxu0 0.0
        %397 = vmatpush1.msra.mxu0 0.0
        %398 = vmatprep.subr.mxu0 0.0
        %399 = vmatpush1.msra.mxu0 0.0
        %400 = vmatprep.subr.mxu0 0.0
        %401 = vmatpush1.msra.mxu0 0.0
        %402 = vmatprep.subr.mxu0 0.0
        %403 = vmatpush1.msra.mxu0 0.0
        %404 = vmatprep.subr.mxu0 0.0
        %405 = vmatpush1.msra.mxu0 0.0
        %406 = vmatprep.subr.mxu0 0.0
        %407 = vmatpush1.msra.mxu0 0.0
        %408 = vmatprep.subr.mxu0 0.0
        %409 = vmatpush1.msra.mxu0 0.0
        %410 = vmatprep.subr.mxu0 0.0
        %411 = vmatpush1.msra.mxu0 0.0
        %412 = vmatprep.subr.mxu0 0.0
        %413 = vmatpush1.msra.mxu0 0.0
        %414 = vmatprep.subr.mxu0 0.0
        %415 = vmatpush1.msra.mxu0 0.0
        %416 = vmatprep.subr.mxu0 0.0
        %417 = vmatpush1.msra.mxu0 0.0
        %418 = vmatprep.subr.mxu0 0.0
        %419 = vmatpush1.msra.mxu0 0.0
        %420 = vmatprep.subr.mxu0 0.0
        %421 = vmatpush1.msra.mxu0 0.0
        %422 = vmatprep.subr.mxu0 0.0
        %423 = vmatpush1.msra.mxu0 0.0
        %424 = vmatprep.subr.mxu0 0.0
        %425 = vmatpush1.msra.mxu0 0.0
        %426 = vmatprep.subr.mxu0 0.0
        %427 = vmatpush1.msra.mxu0 0.0
        %428 = vmatprep.subr.mxu0 0.0
        %429 = vmatpush1.msra.mxu0 0.0
        %430 = vmatprep.subr.mxu0 0.0
        %431 = vmatpush1.msra.mxu0 0.0
        %432 = vmatprep.subr.mxu0 0.0
        %433 = vmatpush1.msra.mxu0 0.0
        %434 = vmatprep.subr.mxu0 0.0
        %435 = vmatpush1.msra.mxu0 0.0
        %436 = vmatprep.subr.mxu0 0.0
        %437 = vmatpush1.msra.mxu0 0.0
        %438 = vmatprep.subr.mxu0 0.0
        %439 = vmatpush1.msra.mxu0 0.0
        %440 = vmatprep.subr.mxu0 0.0
        %441 = vmatpush1.msra.mxu0 0.0
        %442 = vmatprep.mubr.f32.mxu0 0.0
        %443 = vmatmul.mubr.f32.gmra.mrb[0].mxu0 %v376
        %v444 = vpop.f32.mrb[0].mxu0
        %v445 = vadd.f32 0.0, %v444
        %v446 = vpop.f32.mrb[0].mxu0
        %447 = vdwg.mxu0
        %vm448 = vcmask 261120
        %449 = vst.msk [vmem:[%s280] sm:$0xff] %vm448, %v445
        %s450 = sand.u32 %s142, 1
        %s451 = scalar_lea.sflag [#allocation5], %s450
        %s452 = sand.u32 %s142, 1
        %s453 = smul.addr %s452, 8
        %s454 = scalar_lea.vmem [#allocation9], %s453
        // Predicated region
        $region53: #{tpu_custom_call.1} parent=35 // pred_check
          %p455 = pneg %p152
        $region54: #{tpu_custom_call.1} parent=35 // pred_check_branch
          %457 = sbr.rel (%p455) target = $region56
        $region55: #{tpu_custom_call.1} parent=35 // pred_region
          %s459 = ssub.s32 128, 128
          %460 = vsyncadd %s451, %s459
          %s461 = sadd.s32 %s29, %s28
          %s462 = smul.addr %s461, 128
          %s463 = scalar_lea.hbm %s4, %s462
          %s465 = sshll.u32 %s454, 4
          %s466 = int_to_ptr.vmem [resolvable:$true] %s465
          %468 = dma.vmem_to_hbm [thread:$0]  %s466, 128, %s463, %s451
        $region56: #{tpu_custom_call.1} parent=35 // pred_fallthru
          _
      $region36: #{tpu_custom_call.1} parent=5 // pred_fallthru
        _
      %p469 = scmp.le.s32.totalorder 2, %s19
      // Predicated region
      $region57: #{tpu_custom_call.1} parent=5 // pred_check
        %p470 = pneg %p469
      $region58: #{tpu_custom_call.1} parent=5 // pred_check_branch
        %472 = sbr.rel (%p470) target = $region60
      $region59: #{tpu_custom_call.1} parent=5 // pred_region
        %s473 = ssub.s32 %s19, 2
        // Predicated region
        $region61: #{tpu_custom_call.1} parent=59 // pred_check
          %p474 = pneg %p158
        $region62: #{tpu_custom_call.1} parent=59 // pred_check_branch
          %476 = sbr.rel (%p474) target = $region64
        $region63: #{tpu_custom_call.1} parent=59 // pred_region
          %s477 = sand.u32 %s143, 1
          %s478 = scalar_lea.sflag [#allocation5], %s477
          %s479 = sand.u32 %s143, 1
          %s480 = smul.addr %s479, 8
          %s481 = scalar_lea.vmem [#allocation9], %s480
          %482 = dma.done %s478, 128
        $region64: #{tpu_custom_call.1} parent=59 // pred_fallthru
          _
      $region60: #{tpu_custom_call.1} parent=5 // pred_fallthru
        _
    $region6: #{tpu_custom_call.1} parent=1 // loop_footer
      %s23 = sadd.s32 1, %s19
    $region7: #{tpu_custom_call.1} parent=1 // loop_footer_branch
      %18 = sbr.rel target = $region3
    $region8: #{tpu_custom_call.1} parent=1 // loop_exit
      _
    %483 = vsyncpa [#allocation4], 1
    %s484 = scalar_lea.sflag [#allocation4], 1
    %485 = vsyncpa %s484, 1
    %486 = vsyncpa [#allocation7], 1
    %s487 = scalar_lea.sflag [#allocation7], 1
    %488 = vsyncpa %s487, 1
    %489 = vsyncpa [#allocation5], 1
    %s490 = scalar_lea.sflag [#allocation5], 1
    %491 = vsyncpa %s490, 1

</llo_original>
